<compile_context>
chip_gen: v6e
topology: v6e:2x2x1
jax: 0.10.0
libtpu: 0.0.40
codegen_flags: <defaults>
</compile_context>

<pallas_src>
import functools

import jax
import jax.numpy as jnp
import numpy as np
from jax.experimental import pallas as pl
from jax.experimental.pallas import tpu as pltpu


def _pick_tile(dim, target, align):
    """Largest multiple of `align` that evenly divides `dim`, capped at `target`.
    Falls back to the full dim (block == array dim is always legal)."""
    if dim <= target:
        return dim
    t = (min(target, dim) // align) * align
    while t >= align:
        if dim % t == 0:
            return t
        t -= align
    return dim


# ----------------------------- Pallas kernel 0 -------------------------------
# Row L2-normalization (F.normalize, p=2, eps=1e-12) + bf16 hi/lo split of zn.
def _normalize_split_kernel(z_ref, hi_ref, lo_ref):
    z = z_ref[...].astype(jnp.float32)
    norm = jnp.sqrt(jnp.sum(z * z, axis=-1, keepdims=True))
    zn = z / jnp.maximum(norm, 1e-12)
    hi = zn.astype(jnp.bfloat16)
    hi_ref[...] = hi
    lo_ref[...] = (zn - hi.astype(jnp.float32)).astype(jnp.bfloat16)


# ----------------------------- Pallas kernel 1 -------------------------------
# Tiled RBF kernel matrix:  Kpair[h, i, j] = exp(-inv_gamma * (2 - 2 * <zn_i, zn_{h*bs+j}>))
_TRANS_B = (((1,), (1,)), ((), ()))   # contract last dim of both operands (A @ B.T)


def _rbf_matmul_kernel(xh_ref, xl_ref, yh_ref, yl_ref, k_ref, acc_ref, *, inv_gamma):
    @pl.when(pl.program_id(3) == 0)
    def _init():
        acc_ref[...] = jnp.zeros_like(acc_ref)

    xh = xh_ref[...]
    xl = xl_ref[...]
    yh = yh_ref[...]
    yl = yl_ref[...]
    # bf16x3 gram: hi*hi + hi*lo + lo*hi (dropped lo*lo term is ~2^-16 relative).
    acc = jax.lax.dot_general(xh, yh, _TRANS_B, preferred_element_type=jnp.float32)
    acc += jax.lax.dot_general(xh, yl, _TRANS_B, preferred_element_type=jnp.float32)
    acc += jax.lax.dot_general(xl, yh, _TRANS_B, preferred_element_type=jnp.float32)
    acc_ref[...] += acc

    @pl.when(pl.program_id(3) == pl.num_programs(3) - 1)
    def _finalize():
        k_ref[...] = jnp.exp(-inv_gamma * (2.0 - 2.0 * acc_ref[...]))


# ----------------------------- Pallas kernel 2 -------------------------------
# Row-tiled loss / statistics reductions given Ks rows, alpha_full.T rows and alpha_x.
def _loss_stats_kernel(ks_ref, aft_ref, ax_ref, out_ref, acc_ref, *, C):
    tm, bs = ks_ref.shape
    nn = bs - 1
    i = pl.program_id(0)

    @pl.when(i == 0)
    def _init():
        for t in range(7):
            acc_ref[t] = jnp.float32(0.0)

    ks = ks_ref[...]                    # (tm, bs)   rows i*tm .. i*tm+tm-1 of Ks
    aft = aft_ref[...]                  # (tm, bs)   same rows of alpha_full.T
    ax = ax_ref[...]                    # (tm, 1)    alpha_x for these rows

    row = jax.lax.broadcasted_iota(jnp.int32, (tm, bs), 0)
    col = jax.lax.broadcasted_iota(jnp.int32, (tm, bs), 1)
    diag = col == row + i * tm
    diag_vals = jnp.sum(jnp.where(diag, ks, 0.0), axis=1, keepdims=True)   # (tm, 1)

    acc_ref[0] += jnp.sum(aft * ks)                      # sum(alpha_full.T * Ks)  -> neg_loss
    acc_ref[1] += jnp.sum(ax * diag_vals)                # sum(alpha_x * diag(Ks)) -> pos_loss
    acc_ref[2] += jnp.sum(diag_vals)                     # sum(diag(Ks))
    acc_ref[3] += jnp.sum(ks)                            # sum(Ks)
    acc_ref[4] += jnp.sum((aft == 0.0).astype(jnp.float32))   # zeros (incl. bs diag zeros)
    acc_ref[5] += jnp.sum((aft > 0.0).astype(jnp.float32))    # positives
    acc_ref[6] += jnp.sum((aft == C).astype(jnp.float32))     # clipped at C

    @pl.when(i == pl.num_programs(0) - 1)
    def _finalize():
        neg_sum = acc_ref[0]
        pos_sum = acc_ref[1]
        diag_sum = acc_ref[2]
        tot_sum = acc_ref[3]
        nz = acc_ref[4]
        npos = acc_ref[5]
        nc = acc_ref[6]
        out_ref[0] = (neg_sum - pos_sum) / bs            # loss
        out_ref[1] = diag_sum / bs                       # (Ks*pos_mask).sum(1).mean()
        out_ref[2] = (tot_sum - diag_sum) / (bs * nn)    # Kn.mean()
        out_ref[3] = nc / (npos + 1e-10)                 # sparsity
        out_ref[4] = (nz - bs) / (bs * nn)               # num_zero (diag zeros excluded)
        out_ref[5] = jnp.float32(0.0)


# --------------------------------- wrapper -----------------------------------
def mmcl_inv_forward(z, *, sigma=0.07, C=1.0, reg=0.1, multiplier=2):
    n, d = z.shape
    assert n % multiplier == 0
    bs = n // 2
    nn_ = bs - 1
    inv_gamma = 1.0 / float(sigma)

    # (2, bs, d) view: both halves of z addressable by a leading block index, and all
    # BlockSpec tiles stay legal for arbitrary bs (full-dim fallback on small shapes).
    z3 = z.reshape(2, bs, d)            # no host dtype cast; upcast happens in-kernel

    tmz = _pick_tile(bs, 256, 8)        # normalize row tile
    tm = _pick_tile(bs, 256, 8)         # matmul M tile (sublane-aligned)
    tn = _pick_tile(bs, 256, 128)       # matmul N tile (lane-aligned / MXU-aligned)
    tk = _pick_tile(d, 512, 128)        # contraction chunk
    tr = _pick_tile(bs, 256, 8)         # loss-kernel row tile

    # ---- kernel 0: normalize + bf16 hi/lo split --------------------------------
    zn_hi, zn_lo = pl.pallas_call(
        _normalize_split_kernel,
        out_shape=(jax.ShapeDtypeStruct((2, bs, d), jnp.bfloat16),
                   jax.ShapeDtypeStruct((2, bs, d), jnp.bfloat16)),
        grid=(2, bs // tmz),
        in_specs=[pl.BlockSpec((None, tmz, d), lambda h, i: (h, i, 0))],
        out_specs=(pl.BlockSpec((None, tmz, d), lambda h, i: (h, i, 0)),
                   pl.BlockSpec((None, tmz, d), lambda h, i: (h, i, 0))),
        compiler_params=pltpu.CompilerParams(
            dimension_semantics=("parallel", "parallel")),
    )(z3)

    # ---- kernel 1: Kpair[0] = K[:, :bs] (KK),  Kpair[1] = K[:, bs:] (Ks) --------
    kpair = pl.pallas_call(
        functools.partial(_rbf_matmul_kernel, inv_gamma=inv_gamma),
        out_shape=jax.ShapeDtypeStruct((2, bs, bs), jnp.float32),
        grid=(2, bs // tm, bs // tn, d // tk),
        in_specs=[
            pl.BlockSpec((None, tm, tk), lambda h, i, j, k: (0, i, k)),   # lhs hi
            pl.BlockSpec((None, tm, tk), lambda h, i, j, k: (0, i, k)),   # lhs lo
            pl.BlockSpec((None, tn, tk), lambda h, i, j, k: (h, j, k)),   # rhs hi
            pl.BlockSpec((None, tn, tk), lambda h, i, j, k: (h, j, k)),   # rhs lo
        ],
        out_specs=pl.BlockSpec((None, tm, tn), lambda h, i, j, k: (h, i, j)),
        scratch_shapes=[pltpu.VMEM((tm, tn), jnp.float32)],
        compiler_params=pltpu.CompilerParams(
            dimension_semantics=("parallel", "parallel", "parallel", "arbitrary"),
            vmem_limit_bytes=64 * 1024 * 1024),
    )(zn_hi, zn_lo, zn_hi, zn_lo)

    # ---- glue (the torch.no_grad block): batched systems + solve ---------------
    # TODO(synk): the batched dense linear solve (torch.solve) has no clean Pallas
    # primitive; it stays in plain JAX via jnp.linalg.solve.
    KK = kpair[0]                                        # (bs, bs)
    eye = jnp.eye(bs, dtype=jnp.float32)
    KK_d0 = KK * (1.0 - eye)
    M = (1.0 + eye * reg) + KK                           # oneone + KK
    a_idx = jnp.arange(bs)[:, None]
    r_idx = jnp.arange(nn_)[None, :]
    keep = jnp.where(r_idx < a_idx, r_idx, r_idx + 1)    # (bs, nn): column indices != i
    # DD[i,r,c] = M[keep[i,r], keep[i,c]] - KK_d0[i, keep[i,c]] - KK_d0[i, keep[i,r]]
    # (built directly; the O(bs^3) Delta intermediate of the reference is never formed)
    A = M[keep[:, :, None], keep[:, None, :]]            # (bs, nn, nn)
    b = KK_d0[a_idx, keep]                               # (bs, nn)
    DD = A - b[:, :, None] - b[:, None, :]

    alpha_y = jnp.linalg.solve(DD, jnp.full((bs, nn_, 1), 2.0, jnp.float32))[..., 0]
    alpha_y = jnp.maximum(alpha_y, 0.0)                  # relu()
    if C != -1:
        alpha_y = jnp.minimum(alpha_y, C)                # .clamp(max=C)

    # Inverse of the neg_mask masked_select: dense (bs, bs) alpha with a zero diagonal.
    alpha_full = jnp.zeros((bs, bs), jnp.float32).at[
        jnp.broadcast_to(a_idx, (bs, nn_)), keep].set(alpha_y)
    alpha_ft = alpha_full.T                              # rows pair with Ks rows
    alpha_x = jnp.sum(alpha_full, axis=1, keepdims=True)  # (bs, 1)

    # ---- kernel 2: fused loss / statistics reductions ---------------------------
    out = pl.pallas_call(
        functools.partial(_loss_stats_kernel, C=float(C)),
        out_shape=jax.ShapeDtypeStruct((6,), jnp.float32),
        grid=(bs // tr,),
        in_specs=[
            pl.BlockSpec((None, tr, bs), lambda i: (1, i, 0)),   # Ks rows (lane-dense)
            pl.BlockSpec((tr, bs), lambda i: (i, 0)),            # alpha_full.T rows
            pl.BlockSpec((tr, 1), lambda i: (i, 0)),             # alpha_x rows
        ],
        out_specs=pl.BlockSpec(memory_space=pltpu.SMEM),
        scratch_shapes=[pltpu.SMEM((7,), jnp.float32)],
        compiler_params=pltpu.CompilerParams(
            # "arbitrary": the SMEM scalar accumulators carry across the row grid,
            # so this axis must stay sequential.
            dimension_semantics=("arbitrary",),
            vmem_limit_bytes=64 * 1024 * 1024),
    )(kpair, alpha_ft, alpha_x)

    return out[0], out[1], out[2], out[3], out[4], out[5]


# --------------------------- pure-JAX reference ------------------------------
def mmcl_inv_reference(z, *, sigma=0.07, C=1.0, reg=0.1):
    z = z.astype(jnp.float32)
    n, d = z.shape
    bs = n // 2
    nn_ = bs - 1
    zn = z / jnp.maximum(jnp.linalg.norm(z, axis=1, keepdims=True), 1e-12)
    gram = jnp.dot(zn[:bs], zn.T, precision=jax.lax.Precision.HIGHEST)
    K = jnp.exp(-(1.0 / sigma) * (2.0 - 2.0 * gram))
    KK = K[:, :bs]
    eye = jnp.eye(bs)
    KK_d0 = KK * (1 - eye)
    oneone = jnp.ones((bs, bs)) + eye * reg
    Delta = (oneone + KK)[None] - KK_d0[:, None, :] - KK_d0[:, :, None]
    a_idx = jnp.arange(bs)[:, None]
    r_idx = jnp.arange(nn_)[None, :]
    keep = jnp.where(r_idx < a_idx, r_idx, r_idx + 1)
    DD = Delta[jnp.arange(bs)[:, None, None], keep[:, :, None], keep[:, None, :]]
    alpha_y = jnp.linalg.solve(DD, 2.0 * jnp.ones((bs, nn_, 1)))[..., 0]
    alpha_y = jnp.clip(alpha_y, 0.0, C)
    alpha_x = alpha_y.sum(1)
    Ks = K[:, bs:]
    Kn = Ks[keep.T, jnp.arange(bs)[None, :]]             # (nn, bs): Kn[r,a] = Ks[b_r(a), a]
    pos = jnp.diag(Ks)
    pos_loss = jnp.mean(alpha_x * pos)
    neg_loss = jnp.sum(alpha_y.T * Kn) / bs
    loss = neg_loss - pos_loss
    num_zero = jnp.mean((alpha_y == 0).astype(jnp.float32))
    sparsity = jnp.sum((alpha_y == C).astype(jnp.float32)) / (
        jnp.sum((alpha_y > 0).astype(jnp.float32)) + 1e-10)
    return loss, pos.mean(), Kn.mean(), sparsity, num_zero, 0.0


if __name__ == "__main__":
    key = jax.random.PRNGKey(0)
    bs, d = 8, 32
    k1, k2 = jax.random.split(key)
    z1 = jax.random.normal(k1, (bs, d), dtype=jnp.float32)
    z2 = z1 + 0.1 * jax.random.normal(k2, (bs, d), dtype=jnp.float32)   # correlated "view"
    z = jnp.concatenate([z1, z2], axis=0)                               # (2*bs, d)

    out = mmcl_inv_forward(z)
    out = jax.block_until_ready(out)

    ref = mmcl_inv_reference(z)
    for got, want in zip(out[:5], ref[:5]):
        np.testing.assert_allclose(np.asarray(got), np.asarray(want),
                                   rtol=1e-2, atol=2e-3)
    print("KERNEL_OK")
</pallas_src>

<mosaic_0001>
module attributes {stable_mosaic.version = 11 : i64} {
  func.func @_normalize_split_kernel(%arg0: i32, %arg1: i32, %arg2: memref<1x8x32xf32, #tpu.memory_space<vmem>>, %arg3: memref<1x8x32xbf16, #tpu.memory_space<vmem>>, %arg4: memref<1x8x32xbf16, #tpu.memory_space<vmem>>) attributes {dimension_semantics = [#tpu.dimension_semantics<parallel>, #tpu.dimension_semantics<parallel>], iteration_bounds = array<i64: 2, 1>, scalar_prefetch = 0 : i64, scratch_operands = 0 : i64, tpu.core_type = #tpu.core_type<tc>, window_params = [{transform_indices = @transform_0, window_bounds = array<i64: 1, 8, 32>}, {transform_indices = @transform_1, window_bounds = array<i64: 1, 8, 32>}, {transform_indices = @transform_2, window_bounds = array<i64: 1, 8, 32>}]} {
    %c0 = arith.constant 0 : index
    %c0_0 = arith.constant 0 : index
    %c0_1 = arith.constant 0 : index
    %0 = vector.load %arg2[%c0, %c0_0, %c0_1] : memref<1x8x32xf32, #tpu.memory_space<vmem>>, vector<1x8x32xf32>
    %1 = vector.shape_cast %0 : vector<1x8x32xf32> to vector<8x32xf32>
    %2 = arith.mulf %1, %1 : vector<8x32xf32>
    %cst = arith.constant dense<0.000000e+00> : vector<8xf32>
    %3 = vector.multi_reduction <add>, %2, %cst [1] : vector<8x32xf32> to vector<8xf32>
    %4 = vector.shape_cast %3 : vector<8xf32> to vector<8x1xf32>
    %5 = math.sqrt %4 : vector<8x1xf32>
    %cst_2 = arith.constant 9.99999996E-13 : f32
    %6 = vector.broadcast %cst_2 : f32 to vector<8x1xf32>
    %7 = arith.maximumf %5, %6 : vector<8x1xf32>
    %8 = vector.broadcast %7 : vector<8x1xf32> to vector<8x32xf32>
    %9 = arith.divf %1, %8 : vector<8x32xf32>
    %10 = arith.truncf %9 : vector<8x32xf32> to vector<8x32xbf16>
    %c0_3 = arith.constant 0 : index
    %c0_4 = arith.constant 0 : index
    %c0_5 = arith.constant 0 : index
    %11 = vector.load %arg3[%c0_3, %c0_4, %c0_5] : memref<1x8x32xbf16, #tpu.memory_space<vmem>>, vector<1x8x32xbf16>
    %12 = vector.shape_cast %11 : vector<1x8x32xbf16> to vector<8x32xbf16>
    %13 = vector.shape_cast %10 : vector<8x32xbf16> to vector<1x8x32xbf16>
    tpu.vector_store %arg3[%c0_3, %c0_4, %c0_5], %13 {strides = array<i32>} : memref<1x8x32xbf16, #tpu.memory_space<vmem>>, vector<1x8x32xbf16>,
    %14 = arith.extf %10 : vector<8x32xbf16> to vector<8x32xf32>
    %15 = arith.subf %9, %14 : vector<8x32xf32>
    %16 = arith.truncf %15 : vector<8x32xf32> to vector<8x32xbf16>
    %c0_6 = arith.constant 0 : index
    %c0_7 = arith.constant 0 : index
    %c0_8 = arith.constant 0 : index
    %17 = vector.load %arg4[%c0_6, %c0_7, %c0_8] : memref<1x8x32xbf16, #tpu.memory_space<vmem>>, vector<1x8x32xbf16>
    %18 = vector.shape_cast %17 : vector<1x8x32xbf16> to vector<8x32xbf16>
    %19 = vector.shape_cast %16 : vector<8x32xbf16> to vector<1x8x32xbf16>
    tpu.vector_store %arg4[%c0_6, %c0_7, %c0_8], %19 {strides = array<i32>} : memref<1x8x32xbf16, #tpu.memory_space<vmem>>, vector<1x8x32xbf16>,
    return
  }
  func.func @transform_0(%arg0: i32, %arg1: i32) -> (i32, i32, i32) {
    %c0_i32 = arith.constant 0 : i32
    %c0_i32_0 = arith.constant 0 : i32
    return %arg0, %arg1, %c0_i32 : i32, i32, i32
  }
  func.func @transform_1(%arg0: i32, %arg1: i32) -> (i32, i32, i32) {
    %c0_i32 = arith.constant 0 : i32
    %c0_i32_0 = arith.constant 0 : i32
    return %arg0, %arg1, %c0_i32 : i32, i32, i32
  }
  func.func @transform_2(%arg0: i32, %arg1: i32) -> (i32, i32, i32) {
    %c0_i32 = arith.constant 0 : i32
    %c0_i32_0 = arith.constant 0 : i32
    return %arg0, %arg1, %c0_i32 : i32, i32, i32
  }
}

</mosaic_0001>

<llo_original>
// kernel: tpu_custom_call.1
$region0: #{tpu_custom_call.1}
  #allocation0 [shape = 'u32[]', space=smem, size = 0x4, offset = 0x4, fixed_abs, tag = 'smem constant byte address 0x4 - core index']
  #allocation1 [shape = 'u32[144,128]{1,0:T(1,128)}', space=vmem, size = 0x12000, scoped, tag = 'internal scratch']
  %s0 = inlined_call_operand.hbm [shape: f32[2,8,32], index: 0, kind: input, shape index: {}]
  %s1 = inlined_call_operand.hbm [shape: bf16[2,8,32], index: 1, kind: output, shape index: {0}]
  %s2 = inlined_call_operand.hbm [shape: bf16[2,8,32], index: 2, kind: output, shape index: {1}]
  %3 = xla_tuple %s1, %s2
  %s4 = sld [smem:[#allocation0]]
  $region49: #{tpu_custom_call.1} parent=0
    _
  %s6 = ssub.s32 1, %s4
  %s7 = scalar_select 0, %s6, %s4
  $region1: #{tpu_custom_call.1} parent=0
    #allocation2 [shape = 'u8[8192]{0}', space=vmem, size = 0x2000, scoped, tag = 'input window, operand 0']
    #allocation3 [shape = 's32[2]{0}', space=sflag, size = 0x8, scoped, tag = 'scoped memory for tpu_custom_call.1']
    #allocation4 [shape = 's32[2]{0}', space=sflag, size = 0x8, scoped, tag = 'scoped memory for tpu_custom_call.1']
    #allocation5 [shape = 'u8[4096]{0}', space=vmem, size = 0x1000, scoped, tag = 'output window, operand 0']
    #allocation6 [shape = 'u8[4096]{0}', space=vmem, size = 0x1000, scoped, tag = 'output window, operand 1']
    #allocation7 [shape = 's32[2]{0}', space=sflag, size = 0x8, scoped, tag = 'scoped memory for tpu_custom_call.1']
    %8 = vsyncpa [#allocation3], 0
    %s9 = scalar_lea.sflag [#allocation3], 1
    %10 = vsyncpa %s9, 0
    %11 = vsyncpa [#allocation4], 0
    %s12 = scalar_lea.sflag [#allocation4], 1
    %13 = vsyncpa %s12, 0
    %14 = vsyncpa [#allocation7], 0
    %s15 = scalar_lea.sflag [#allocation7], 1
    %16 = vsyncpa %s15, 0
    loop: start=0, step=1, limit=4
    $region2: #{tpu_custom_call.1} parent=1 // loop_pre_header
      _
    $region3: #{tpu_custom_call.1} parent=1 // loop_header
      %s18 = sphi 0, %s22
      %p19 = scmp.ge.s32.totalorder %s18, 4
      %s25 = sphi 0, %s37
      %s26 = sphi 0, %s33
      %s27 = sphi 0, %s25
      %s28 = sphi 0, %s26
      %s29 = sphi 0, %s27
      %s30 = sphi 0, %s28
      %s42 = sphi 0, %s44
      %s45 = sphi 0, %s42
      %s46 = sphi 0, %s45
      %s62 = sphi 0, %s46
      %s70 = sphi 0, %s72
      %s73 = sphi 0, %s70
      %s74 = sphi 0, %s73
      %s90 = sphi 0, %s74
      %s98 = sphi 0, %s100
      %s101 = sphi 0, %s98
      %s102 = sphi 0, %s101
      %s118 = sphi 0, %s102
    $region4: #{tpu_custom_call.1} parent=1 // loop_header_branch
      %21 = sbr.rel (%p19) target = $region8
    $region5: #{tpu_custom_call.1} parent=1 // loop_body
      %s23 = ssub.s32 %s18, 1
      %s24 = ssub.s32 %s18, 2
      %s31 = sadd.s32 1, %s26
      %p32 = scmp.ge.s32.totalorder %s31, 1
      %s33 = scalar_select %p32, 0, %s31
      %s34 = sadd.s32 1, %s25
      %s35 = scalar_select %p32, %s34, %s25
      %p36 = scmp.ge.s32.totalorder %s35, 2
      %s37 = scalar_select %p36, 0, %s35
      %s38 = ssub.s32 %s25, %s37
      %s39 = ssub.s32 %s26, %s33
      %s40 = sor.u32 %s38, %s39
      %p41 = scmp.eq.s32.totalorder %s40, 0
      %s43 = sadd.s32 %s42, 1
      %s44 = scalar_select %p41, %s42, %s43
      %p47 = pneg %p41
      %p48 = scmp.eq.s32.totalorder %s18, 1
      %p49 = por %p47, %p48
      %p50 = scmp.ne.s32.totalorder %s42, %s45
      %p51 = scmp.eq.s32.totalorder %s18, 0
      %p52 = por %p50, %p51
      %p53 = scmp.ne.s32.totalorder %s42, %s45
      %p54 = scmp.eq.s32.totalorder %s23, 1
      %p55 = por %p53, %p54
      %p56 = scmp.ne.s32.totalorder %s45, %s46
      %p57 = scmp.eq.s32.totalorder %s23, 0
      %p58 = por %p56, %p57
      %p59 = scmp.ne.s32.totalorder %s45, %s46
      %p60 = scmp.eq.s32.totalorder %s24, 1
      %p61 = por %p59, %p60
      %p63 = scmp.ne.s32.totalorder %s46, %s62
      %p64 = scmp.eq.s32.totalorder %s24, 0
      %p65 = por %p63, %p64
      %s66 = ssub.s32 %s25, %s37
      %s67 = ssub.s32 %s26, %s33
      %s68 = sor.u32 %s66, %s67
      %p69 = scmp.eq.s32.totalorder %s68, 0
      %s71 = sadd.s32 %s70, 1
      %s72 = scalar_select %p69, %s70, %s71
      %p75 = pneg %p69
      %p76 = scmp.eq.s32.totalorder %s18, 1
      %p77 = por %p75, %p76
      %p78 = scmp.ne.s32.totalorder %s70, %s73
      %p79 = scmp.eq.s32.totalorder %s18, 0
      %p80 = por %p78, %p79
      %p81 = scmp.ne.s32.totalorder %s70, %s73
      %p82 = scmp.eq.s32.totalorder %s23, 1
      %p83 = por %p81, %p82
      %p84 = scmp.ne.s32.totalorder %s73, %s74
      %p85 = scmp.eq.s32.totalorder %s23, 0
      %p86 = por %p84, %p85
      %p87 = scmp.ne.s32.totalorder %s73, %s74
      %p88 = scmp.eq.s32.totalorder %s24, 1
      %p89 = por %p87, %p88
      %p91 = scmp.ne.s32.totalorder %s74, %s90
      %p92 = scmp.eq.s32.totalorder %s24, 0
      %p93 = por %p91, %p92
      %s94 = ssub.s32 %s25, %s37
      %s95 = ssub.s32 %s26, %s33
      %s96 = sor.u32 %s94, %s95
      %p97 = scmp.eq.s32.totalorder %s96, 0
      %s99 = sadd.s32 %s98, 1
      %s100 = scalar_select %p97, %s98, %s99
      %p103 = pneg %p97
      %p104 = scmp.eq.s32.totalorder %s18, 1
      %p105 = por %p103, %p104
      %p106 = scmp.ne.s32.totalorder %s98, %s101
      %p107 = scmp.eq.s32.totalorder %s18, 0
      %p108 = por %p106, %p107
      %p109 = scmp.ne.s32.totalorder %s98, %s101
      %p110 = scmp.eq.s32.totalorder %s23, 1
      %p111 = por %p109, %p110
      %p112 = scmp.ne.s32.totalorder %s101, %s102
      %p113 = scmp.eq.s32.totalorder %s23, 0
      %p114 = por %p112, %p113
      %p115 = scmp.ne.s32.totalorder %s101, %s102
      %p116 = scmp.eq.s32.totalorder %s24, 1
      %p117 = por %p115, %p116
      %p119 = scmp.ne.s32.totalorder %s102, %s118
      %p120 = scmp.eq.s32.totalorder %s24, 0
      %p121 = por %p119, %p120
      %p122 = scmp.le.s32.totalorder 1, %s18
      %p123 = scmp.lt.s32.totalorder %s18, 3
      %p124 = pnand %p122, %p123
      %p125 = pneg %p124
      // Predicated region
      $region9: #{tpu_custom_call.1} parent=5 // pred_check
        _
      $region10: #{tpu_custom_call.1} parent=5 // pred_check_branch
        %127 = sbr.rel (%p124) target = $region12
      $region11: #{tpu_custom_call.1} parent=5 // pred_region
        %s128 = ssub.s32 %s18, 1
      $region12: #{tpu_custom_call.1} parent=5 // pred_fallthru
        _
      %p129 = scmp.lt.s32.totalorder %s18, 2
      // Predicated region
      $region13: #{tpu_custom_call.1} parent=5 // pred_check
        %p130 = pneg %p129
      $region14: #{tpu_custom_call.1} parent=5 // pred_check_branch
        %132 = sbr.rel (%p130) target = $region16
      $region15: #{tpu_custom_call.1} parent=5 // pred_region
        // Predicated region
        $region17: #{tpu_custom_call.1} parent=15 // pred_check
          %p133 = pneg %p52
        $region18: #{tpu_custom_call.1} parent=15 // pred_check_branch
          %135 = sbr.rel (%p133) target = $region20
        $region19: #{tpu_custom_call.1} parent=15 // pred_region
          %s136 = sand.u32 %s42, 1
          %s137 = scalar_lea.sflag [#allocation3], %s136
          %s138 = sand.u32 %s42, 1
          %s139 = smul.addr %s138, 8
          %s140 = scalar_lea.vmem [#allocation2], %s139
          %s142 = ssub.s32 128, 128
          %143 = vsyncadd %s137, %s142
          %s144 = sadd.s32 %s26, %s25
          %s145 = smul.addr %s144, 128
          %s146 = scalar_lea.hbm %s0, %s145
          %s148 = sshll.u32 %s140, 4
          %s149 = int_to_ptr.vmem [resolvable:$true] %s148
          %151 = dma.hbm_to_vmem [thread:$0]  %s146, 128, %s149, %s137
        $region20: #{tpu_custom_call.1} parent=15 // pred_fallthru
          _
      $region16: #{tpu_custom_call.1} parent=5 // pred_fallthru
        _
      %p152 = scmp.le.s32.totalorder 1, %s18
      %p153 = scmp.lt.s32.totalorder %s18, 3
      %p154 = pnand %p152, %p153
      %p155 = pneg %p154
      // Predicated region
      $region21: #{tpu_custom_call.1} parent=5 // pred_check
        _
      $region22: #{tpu_custom_call.1} parent=5 // pred_check_branch
        %157 = sbr.rel (%p154) target = $region24
      $region23: #{tpu_custom_call.1} parent=5 // pred_region
        %s158 = ssub.s32 %s18, 1
        %s159 = sand.u32 %s45, 1
        %s160 = scalar_lea.sflag [#allocation3], %s159
        %s161 = sand.u32 %s45, 1
        %s162 = smul.addr %s161, 8
        %s163 = scalar_lea.vmem [#allocation2], %s162
        // Predicated region
        $region25: #{tpu_custom_call.1} parent=23 // pred_check
          %p164 = pneg %p58
        $region26: #{tpu_custom_call.1} parent=23 // pred_check_branch
          %166 = sbr.rel (%p164) target = $region28
        $region27: #{tpu_custom_call.1} parent=23 // pred_region
          %167 = dma.done %s160, 128
        $region28: #{tpu_custom_call.1} parent=23 // pred_fallthru
          _
        %s168 = sand.u32 %s45, 1
        %s169 = scalar_lea.sflag [#allocation3], %s168
        %s170 = sand.u32 %s45, 1
        %s171 = smul.addr %s170, 8
        %s172 = scalar_lea.vmem [#allocation2], %s171
        %p173 = pneg %p58
        %p174 = pneg %p55
        %p175 = pneg %p86
        %p176 = pneg %p83
        %s177 = sand.u32 %s73, 1
        %s178 = scalar_lea.sflag [#allocation4], %s177
        %s179 = sand.u32 %s73, 1
        %s180 = smul.addr %s179, 4
        %s181 = scalar_lea.vmem [#allocation5], %s180
        %p182 = pneg %p114
        %p183 = pneg %p111
        %s184 = sand.u32 %s101, 1
        %s185 = scalar_lea.sflag [#allocation7], %s184
        %s186 = sand.u32 %s101, 1
        %s187 = smul.addr %s186, 4
        %s188 = scalar_lea.vmem [#allocation6], %s187
        %v189 = vld [vmem:[%s163] sm:$0xff]
        %v190 = vmul.f32 %v189, %v189
        %vm191 = vcmask 261120
        %v192 = vsel %vm191, %v190, 0.0
        %193 = vadd.xlane.f32.xlu0 %v192
        %v194 = vpop.xlane.xlu0 %193
        %v195 = vrsqrt.pop %v194
        %v196 = vmul.f32 %v194, %v195
        %vm197 = vcmp.eq.f32.partialorder %v194, inf
        %v198 = vsel %vm197, %v194, %v196
        %vm199 = vcmp.eq.f32.partialorder %v194, 0.0
        %v200 = vand.u32 %v194, 2147483648
        %v201 = vsel %vm199, %v200, %v198
        %v202 = vmax.f32 %v201, 1e-12
        %v203 = vrcp.pop %v202
        %v204 = vmul.f32 %v189, %v203
        %v205 = vpack.c.bf16 %v204, %v204
        %vm206 = vcmask 257024
        %207 = vst.msk [vmem:[%s181] sm:$0xf] %vm206, %v205
        %v208 = vunpack.c.l.bf16 %v205
        %v209 = vsub.f32 %v204, %v208
        %v210 = vpack.c.bf16 %v209, %v209
        %211 = vst.msk [vmem:[%s188] sm:$0xf] %vm206, %v210
        %s212 = sand.u32 %s73, 1
        %s213 = scalar_lea.sflag [#allocation4], %s212
        %s214 = sand.u32 %s73, 1
        %s215 = smul.addr %s214, 4
        %s216 = scalar_lea.vmem [#allocation5], %s215
        %s217 = sand.u32 %s101, 1
        %s218 = scalar_lea.sflag [#allocation7], %s217
        %s219 = sand.u32 %s101, 1
        %s220 = smul.addr %s219, 4
        %s221 = scalar_lea.vmem [#allocation6], %s220
        // Predicated region
        $region29: #{tpu_custom_call.1} parent=23 // pred_check
          %p222 = pneg %p83
        $region30: #{tpu_custom_call.1} parent=23 // pred_check_branch
          %224 = sbr.rel (%p222) target = $region32
        $region31: #{tpu_custom_call.1} parent=23 // pred_region
          %s226 = ssub.s32 64, 64
          %227 = vsyncadd %s213, %s226
          %s228 = sadd.s32 %s28, %s27
          %s229 = smul.addr %s228, 64
          %s230 = scalar_lea.hbm %s1, %s229
          %s232 = sshll.u32 %s216, 4
          %s233 = int_to_ptr.vmem [resolvable:$true] %s232
          %235 = dma.vmem_to_hbm [thread:$0]  %s233, 64, %s230, %s213
        $region32: #{tpu_custom_call.1} parent=23 // pred_fallthru
          _
        // Predicated region
        $region33: #{tpu_custom_call.1} parent=23 // pred_check
          %p236 = pneg %p111
        $region34: #{tpu_custom_call.1} parent=23 // pred_check_branch
          %238 = sbr.rel (%p236) target = $region36
        $region35: #{tpu_custom_call.1} parent=23 // pred_region
          %s240 = ssub.s32 64, 64
          %241 = vsyncadd %s218, %s240
          %s242 = sadd.s32 %s28, %s27
          %s243 = smul.addr %s242, 64
          %s244 = scalar_lea.hbm %s2, %s243
          %s246 = sshll.u32 %s221, 4
          %s247 = int_to_ptr.vmem [resolvable:$true] %s246
          %249 = dma.vmem_to_hbm [thread:$0]  %s247, 64, %s244, %s218
        $region36: #{tpu_custom_call.1} parent=23 // pred_fallthru
          _
      $region24: #{tpu_custom_call.1} parent=5 // pred_fallthru
        _
      %p250 = scmp.le.s32.totalorder 2, %s18
      // Predicated region
      $region37: #{tpu_custom_call.1} parent=5 // pred_check
        %p251 = pneg %p250
      $region38: #{tpu_custom_call.1} parent=5 // pred_check_branch
        %253 = sbr.rel (%p251) target = $region40
      $region39: #{tpu_custom_call.1} parent=5 // pred_region
        %s254 = ssub.s32 %s18, 2
        // Predicated region
        $region41: #{tpu_custom_call.1} parent=39 // pred_check
          %p255 = pneg %p89
        $region42: #{tpu_custom_call.1} parent=39 // pred_check_branch
          %257 = sbr.rel (%p255) target = $region44
        $region43: #{tpu_custom_call.1} parent=39 // pred_region
          %s258 = sand.u32 %s74, 1
          %s259 = scalar_lea.sflag [#allocation4], %s258
          %s260 = sand.u32 %s74, 1
          %s261 = smul.addr %s260, 4
          %s262 = scalar_lea.vmem [#allocation5], %s261
          %263 = dma.done %s259, 64
        $region44: #{tpu_custom_call.1} parent=39 // pred_fallthru
          _
        // Predicated region
        $region45: #{tpu_custom_call.1} parent=39 // pred_check
          %p264 = pneg %p117
        $region46: #{tpu_custom_call.1} parent=39 // pred_check_branch
          %266 = sbr.rel (%p264) target = $region48
        $region47: #{tpu_custom_call.1} parent=39 // pred_region
          %s267 = sand.u32 %s102, 1
          %s268 = scalar_lea.sflag [#allocation7], %s267
          %s269 = sand.u32 %s102, 1
          %s270 = smul.addr %s269, 4
          %s271 = scalar_lea.vmem [#allocation6], %s270
          %272 = dma.done %s268, 64
        $region48: #{tpu_custom_call.1} parent=39 // pred_fallthru
          _
      $region40: #{tpu_custom_call.1} parent=5 // pred_fallthru
        _
    $region6: #{tpu_custom_call.1} parent=1 // loop_footer
      %s22 = sadd.s32 1, %s18
    $region7: #{tpu_custom_call.1} parent=1 // loop_footer_branch
      %17 = sbr.rel target = $region3
    $region8: #{tpu_custom_call.1} parent=1 // loop_exit
      _
    %273 = vsyncpa [#allocation3], 1
    %s274 = scalar_lea.sflag [#allocation3], 1
    %275 = vsyncpa %s274, 1
    %276 = vsyncpa [#allocation4], 1
    %s277 = scalar_lea.sflag [#allocation4], 1
    %278 = vsyncpa %s277, 1
    %279 = vsyncpa [#allocation7], 1
    %s280 = scalar_lea.sflag [#allocation7], 1
    %281 = vsyncpa %s280, 1

</llo_original>
